<compile_context>
chip_gen: v7x
topology: tpu7x:2x2x1
jax: 0.10.0
libtpu: 0.0.40
codegen_flags: <defaults>
</compile_context>

<pallas_src>
import math

import jax
import jax.numpy as jnp
from jax.experimental import pallas as pl
from jax.experimental.pallas import tpu as pltpu

_LANES = 512                 # lane-dense last dim (multiple of 128)
_MAX_TILE_ROWS = 2048        # 2048 x 512 f32 = 4 MiB per tile buffer
_SINGLE_BLOCK_ROWS = 256     # <= 512 KiB f32: one block, skip grid overhead
_FAST_PATH_ELEMS = 1 << 18   # < ~1 MiB f32: plain XLA beats kernel launch cost
_VMEM_LIMIT_BYTES = 40 << 20 # fits v7x's 64 MiB physical VMEM with headroom


def _deep_kernel(x_ref, o_ref):
    # DeepModel == block(block(x)) == 4 * relu(x).
    # Weak-typed 0 / 4 keep the input dtype (exact for floats: power-of-two scale).
    o_ref[...] = jnp.maximum(x_ref[...], 0) * 4


def _sublane(dtype) -> int:
    # Packed sublane multiple: 8 for 4-byte, 16 for 2-byte, 32 for 1-byte dtypes.
    return max(8, 32 // jnp.dtype(dtype).itemsize)


def _round_up(n: int, m: int) -> int:
    return pl.cdiv(n, m) * m


def deep_model(x: jax.Array, *, force_pallas: bool = False) -> jax.Array:
    """DeepModel forward: NCHW (or any-shaped) array -> same shape/dtype."""
    orig_shape = x.shape
    total = math.prod(orig_shape)

    # Small-input fast path: kernel launch + layout plumbing would dominate.
    if total < _FAST_PATH_ELEMS and not force_pallas:
        return jnp.maximum(x, 0) * 4

    sub = _sublane(x.dtype)
    flat = x.reshape(-1)

    rows = pl.cdiv(total, _LANES)
    if total % _LANES != 0:
        # Pad only up to a lane/sublane multiple (NOT up to the row tile);
        # zero pad is harmless (relu(0) == 0) and sliced off below.
        rows = _round_up(rows, sub)
        flat = jnp.pad(flat, (0, rows * _LANES - total))
    x2d = flat.reshape(rows, _LANES)

    if rows <= _SINGLE_BLOCK_ROWS:
        # One block; block_shape == full array dims is always legal.
        tile_rows = rows
    else:
        # At least 2 blocks so v7x's two TensorCores both get work, capped at
        # _MAX_TILE_ROWS (4 MiB f32 per buffer). Partial last block is masked.
        tile_rows = min(_MAX_TILE_ROWS, _round_up(pl.cdiv(rows, 2), sub))
    grid_n = pl.cdiv(rows, tile_rows)

    out2d = pl.pallas_call(
        _deep_kernel,
        out_shape=jax.ShapeDtypeStruct((rows, _LANES), x.dtype),
        grid=(grid_n,),
        in_specs=[pl.BlockSpec((tile_rows, _LANES), lambda i: (i, 0))],
        out_specs=pl.BlockSpec((tile_rows, _LANES), lambda i: (i, 0)),
        compiler_params=pltpu.CompilerParams(
            dimension_semantics=("parallel",),
            vmem_limit_bytes=_VMEM_LIMIT_BYTES,
        ),
    )(x2d)

    out_flat = out2d.reshape(-1)
    if out_flat.shape[0] != total:
        out_flat = out_flat[:total]
    return out_flat.reshape(orig_shape)


if __name__ == "__main__":
    key = jax.random.PRNGKey(0)
    k1, k2 = jax.random.split(key)

    # Reference: the un-collapsed op graph, applied twice (DeepModel = 2 blocks).
    def _block_ref(v):
        o1 = jnp.maximum(v, 0.0)
        return jnp.maximum(jnp.maximum(o1, 0.0) + jnp.maximum(o1, 0.0), 0.0)

    def _ref(v):
        return _block_ref(_block_ref(v))

    # Shipped module shape: batch_size=1, input_type=(2, 28, 28) -> NCHW (1,2,28,28).
    x_small = jax.random.normal(k1, (1, 2, 28, 28), dtype=jnp.float32)

    # 1) Default path (small-input XLA fast path).
    out_small = jax.block_until_ready(deep_model(x_small))
    assert out_small.shape == x_small.shape and out_small.dtype == x_small.dtype
    assert jnp.allclose(out_small, _ref(x_small)), "fast-path mismatch vs reference"

    # 2) Same shape forced through the Pallas kernel (exercises pad + single block).
    out_small_pl = jax.block_until_ready(deep_model(x_small, force_pallas=True))
    assert out_small_pl.shape == x_small.shape and out_small_pl.dtype == x_small.dtype
    assert jnp.allclose(out_small_pl, _ref(x_small)), "pallas (padded) mismatch vs reference"

    # 3) Lane-aligned medium tensor: no pad/slice, multi-block "parallel" grid.
    x_med = jax.random.normal(k2, (8, 8, 64, 64), dtype=jnp.float32)
    out_med = jax.block_until_ready(deep_model(x_med))
    assert out_med.shape == x_med.shape and out_med.dtype == x_med.dtype
    assert jnp.allclose(out_med, _ref(x_med)), "pallas (aligned) mismatch vs reference"

    print("KERNEL_OK")
</pallas_src>

<mosaic_0001>
module attributes {stable_mosaic.version = 11 : i64} {
  func.func @_deep_kernel(%arg0: i32, %arg1: memref<8x512xf32, #tpu.memory_space<vmem>>, %arg2: memref<8x512xf32, #tpu.memory_space<vmem>>) attributes {dimension_semantics = [#tpu.dimension_semantics<parallel>], iteration_bounds = array<i64: 1>, scalar_prefetch = 0 : i64, scratch_operands = 0 : i64, tpu.core_type = #tpu.core_type<tc>, window_params = [{transform_indices = @transform_0, window_bounds = array<i64: 8, 512>}, {transform_indices = @transform_1, window_bounds = array<i64: 8, 512>}]} {
    %c0 = arith.constant 0 : index
    %c0_0 = arith.constant 0 : index
    %0 = vector.load %arg1[%c0, %c0_0] : memref<8x512xf32, #tpu.memory_space<vmem>>, vector<8x512xf32>
    %cst = arith.constant 0.000000e+00 : f32
    %1 = vector.broadcast %cst : f32 to vector<8x512xf32>
    %2 = arith.maximumf %0, %1 : vector<8x512xf32>
    %cst_1 = arith.constant 4.000000e+00 : f32
    %3 = vector.broadcast %cst_1 : f32 to vector<8x512xf32>
    %4 = arith.mulf %2, %3 : vector<8x512xf32>
    %c0_2 = arith.constant 0 : index
    %c0_3 = arith.constant 0 : index
    %5 = vector.load %arg2[%c0_2, %c0_3] : memref<8x512xf32, #tpu.memory_space<vmem>>, vector<8x512xf32>
    tpu.vector_store %arg2[%c0_2, %c0_3], %4 {strides = array<i32>} : memref<8x512xf32, #tpu.memory_space<vmem>>, vector<8x512xf32>,
    return
  }
  func.func @transform_0(%arg0: i32) -> (i32, i32) {
    %c0_i32 = arith.constant 0 : i32
    %c0_i32_0 = arith.constant 0 : i32
    return %arg0, %c0_i32 : i32, i32
  }
  func.func @transform_1(%arg0: i32) -> (i32, i32) {
    %c0_i32 = arith.constant 0 : i32
    %c0_i32_0 = arith.constant 0 : i32
    return %arg0, %c0_i32 : i32, i32
  }
}

</mosaic_0001>

<llo_original>
// kernel: tpu_custom_call.1
$region0: #{tpu_custom_call.1}
  #allocation0 [shape = 'u32[]', space=smem, size = 0x4, offset = 0x4, fixed_abs, tag = 'smem constant byte address 0x4 - core index']
  #allocation1 [shape = 'u32[144,128]{1,0:T(1,128)}', space=vmem, size = 0x12000, scoped, tag = 'internal scratch']
  %s0 = inlined_call_operand.hbm [shape: f32[8,512], index: 0, kind: input, shape index: {}]
  %s1 = inlined_call_operand.hbm [shape: f32[8,512], index: 1, kind: output, shape index: {}]
  %s2 = sld [smem:[#allocation0]]
  $region18: #{tpu_custom_call.1} parent=0
    _
  %s4 = ssub.s32 1, %s2
  %s5 = scalar_select 0, %s4, %s2
  $region1: #{tpu_custom_call.1} parent=0
    #allocation2 [shape = 'u8[16384]{0}', space=vmem, size = 0x4000, scoped, tag = 'input window, operand 0, single buffered']
    #allocation3 [shape = 's32[1]{0}', space=sflag, size = 0x4, scoped, tag = 'scoped memory for tpu_custom_call.1']
    #allocation4 [shape = 's32[1]{0}', space=sflag, size = 0x4, scoped, tag = 'scoped memory for tpu_custom_call.1']
    #allocation5 [shape = 'u8[16384]{0}', space=vmem, size = 0x4000, scoped, tag = 'output window, operand 0, single buffered']
    %6 = vsyncpa [#allocation3], 0
    %7 = vsyncpa [#allocation4], 0
    // Predicated region
    $region2: #{tpu_custom_call.1} parent=1 // pred_check
      _
    $region3: #{tpu_custom_call.1} parent=1 // pred_check_branch
      %9 = sbr.rel (0) target = $region5
    $region4: #{tpu_custom_call.1} parent=1 // pred_region
      %s11 = ssub.s32 512, 512
      %12 = vsyncadd [#allocation3], %s11
      %s14 = sshll.u32 [#allocation2], 4
      %s15 = int_to_ptr.vmem [resolvable:$true] %s14
      %17 = dma.hbm_to_vmem [thread:$0]  %s0, 512, %s15, [#allocation3]
    $region5: #{tpu_custom_call.1} parent=1 // pred_fallthru
      _
    // Predicated region
    $region6: #{tpu_custom_call.1} parent=1 // pred_check
      _
    $region7: #{tpu_custom_call.1} parent=1 // pred_check_branch
      %19 = sbr.rel (0) target = $region9
    $region8: #{tpu_custom_call.1} parent=1 // pred_region
      %20 = dma.done [#allocation3], 512
    $region9: #{tpu_custom_call.1} parent=1 // pred_fallthru
      _
    %v21 = vld [vmem:[#allocation2] sm:$0xff]
    %v22 = vld [vmem:[#allocation2 + $0x8] sm:$0xff]
    %v23 = vld [vmem:[#allocation2 + $0x10] sm:$0xff]
    %v24 = vld [vmem:[#allocation2 + $0x18] sm:$0xff]
    %v25 = vmax.f32 %v21, 0.0
    %v26 = vmax.f32 %v22, 0.0
    %v27 = vmax.f32 %v23, 0.0
    %v28 = vmax.f32 %v24, 0.0
    %v29 = vmul.f32 %v25, 4.0
    %v30 = vmul.f32 %v26, 4.0
    %v31 = vmul.f32 %v27, 4.0
    %v32 = vmul.f32 %v28, 4.0
    %33 = vst [vmem:[#allocation5] sm:$0xff] %v29
    %34 = vst [vmem:[#allocation5 + $0x8] sm:$0xff] %v30
    %35 = vst [vmem:[#allocation5 + $0x10] sm:$0xff] %v31
    %36 = vst [vmem:[#allocation5 + $0x18] sm:$0xff] %v32
    // Predicated region
    $region10: #{tpu_custom_call.1} parent=1 // pred_check
      _
    $region11: #{tpu_custom_call.1} parent=1 // pred_check_branch
      %38 = sbr.rel (0) target = $region13
    $region12: #{tpu_custom_call.1} parent=1 // pred_region
      %s40 = ssub.s32 512, 512
      %41 = vsyncadd [#allocation4], %s40
      %s43 = sshll.u32 [#allocation5], 4
      %s44 = int_to_ptr.vmem [resolvable:$true] %s43
      %46 = dma.vmem_to_hbm [thread:$0]  %s44, 512, %s1, [#allocation4]
    $region13: #{tpu_custom_call.1} parent=1 // pred_fallthru
      _
    // Predicated region
    $region14: #{tpu_custom_call.1} parent=1 // pred_check
      _
    $region15: #{tpu_custom_call.1} parent=1 // pred_check_branch
      %48 = sbr.rel (0) target = $region17
    $region16: #{tpu_custom_call.1} parent=1 // pred_region
      %49 = dma.done [#allocation4], 512
    $region17: #{tpu_custom_call.1} parent=1 // pred_fallthru
      _
    %50 = vsyncpa [#allocation3], 1
    %51 = vsyncpa [#allocation4], 1

</llo_original>
